<compile_context>
chip_gen: v5e
topology: v5e:2x2
jax: 0.10.0
libtpu: 0.0.40
codegen_flags: <defaults>
</compile_context>

<pallas_src>
import functools
import math

import jax
import jax.numpy as jnp
from jax.experimental import pallas as pl
from jax.experimental.pallas import tpu as pltpu


# ----------------------------------------------------------------------------
# Kernels (all refs are (tT, D2) after squeezing the leading batch dim)
# ----------------------------------------------------------------------------
def _pe_add_kernel(x_ref, pe_ref, o_ref, *, xscale):
    val = x_ref[...].astype(jnp.float32) * xscale + pe_ref[...]
    o_ref[...] = val.astype(o_ref.dtype)


def _pe_add_dropout_kernel(x_ref, pe_ref, u_ref, o_ref, *, xscale, keep_prob):
    val = x_ref[...].astype(jnp.float32) * xscale + pe_ref[...]
    keep = u_ref[...] < keep_prob
    val = jnp.where(keep, val * (1.0 / keep_prob), 0.0)
    o_ref[...] = val.astype(o_ref.dtype)


# ----------------------------------------------------------------------------
# Layout helpers
# ----------------------------------------------------------------------------
def _fold_for_lane_density(T, D):
    """Fold consecutive time steps into the lane dim so last dim >= 128."""
    fold = 1
    if D < 128:
        need = -(-128 // D)  # ceil(128 / D)
        for c in range(need, T + 1):
            if T % c == 0:
                fold = c
                break
    return T // fold, D * fold  # (T2, D2)


def _choose_row_tile(T2, D2, itemsize=4, target_bytes=1 << 20):
    """Pick the time-tile so a block is ~1 MiB (multiple of 8 rows or full)."""
    rows = max(1, target_bytes // (D2 * itemsize))
    if rows >= T2:
        return T2
    rows = max(8, (rows // 8) * 8)
    return min(rows, T2)


# ----------------------------------------------------------------------------
# Module factory
# ----------------------------------------------------------------------------
def make_positional_encoding(d_model: int, dropout_rate: float, max_len: int = 5000):
    """Build the pe table (plain JAX glue) and return (forward, pe, xscale)."""
    position = jnp.arange(0, max_len, dtype=jnp.float32)[:, None]        # (max_len, 1)
    div_term = jnp.exp(
        jnp.arange(0, d_model, 2, dtype=jnp.float32)
        * -(math.log(10000.0) / d_model)
    )                                                                    # (d_model//2,)
    pe = jnp.zeros((max_len, d_model), dtype=jnp.float32)
    pe = pe.at[:, 0::2].set(jnp.sin(position * div_term))
    pe = pe.at[:, 1::2].set(jnp.cos(position * div_term))
    xscale = math.sqrt(d_model)

    def forward(x, *, training: bool = False, key=None):
        B, T, D = x.shape
        assert D == d_model and T <= max_len

        use_dropout = training and dropout_rate > 0.0
        if use_dropout and dropout_rate >= 1.0:
            # torch.nn.Dropout(p=1.0) zeroes everything in training mode.
            return jnp.zeros_like(x)

        # Lane-dense reshape (free: contiguous relabeling of the same elements).
        T2, D2 = _fold_for_lane_density(T, D)
        x2 = x.reshape(B, T2, D2)
        pe2 = pe[:T].reshape(T2, D2)

        tT = _choose_row_tile(T2, D2)
        nT = pl.cdiv(T2, tT)

        # Batch is the INNER grid axis -> pe block index constant across it.
        x_spec = pl.BlockSpec((None, tT, D2), lambda t, b: (b, t, 0))
        pe_spec = pl.BlockSpec((tT, D2), lambda t, b: (t, 0))
        out_spec = pl.BlockSpec((None, tT, D2), lambda t, b: (b, t, 0))

        if use_dropout:
            if key is None:
                key = jax.random.PRNGKey(0)
            u = jax.random.uniform(key, (B, T2, D2), dtype=jnp.float32)
            kernel = functools.partial(
                _pe_add_dropout_kernel,
                xscale=xscale,
                keep_prob=1.0 - dropout_rate,
            )
            in_specs = [x_spec, pe_spec,
                        pl.BlockSpec((None, tT, D2), lambda t, b: (b, t, 0))]
            args = (x2, pe2, u)
        else:
            kernel = functools.partial(_pe_add_kernel, xscale=xscale)
            in_specs = [x_spec, pe_spec]
            args = (x2, pe2)

        out2 = pl.pallas_call(
            kernel,
            out_shape=jax.ShapeDtypeStruct((B, T2, D2), x.dtype),
            grid=(nT, B),
            in_specs=in_specs,
            out_specs=out_spec,
            compiler_params=pltpu.CompilerParams(
                dimension_semantics=("parallel", "parallel"),
            ),
        )(*args)
        return out2.reshape(B, T, D)

    return forward, pe, xscale


# ----------------------------------------------------------------------------
# Self-test
# ----------------------------------------------------------------------------
if __name__ == "__main__":
    B, T, D = 2, 8, 32
    d_model = D
    dropout_rate = 0.1
    max_len = 64

    key = jax.random.PRNGKey(0)
    x = jax.random.normal(key, (B, T, D), dtype=jnp.float32)

    forward, pe, xscale = make_positional_encoding(d_model, dropout_rate, max_len)

    # Eval mode (dropout is identity): deterministic check vs plain-JAX ref.
    out = jax.block_until_ready(forward(x, training=False))
    ref = x * xscale + pe[None, :T, :]
    assert out.shape == (B, T, D)
    assert jnp.allclose(out, ref, atol=1e-5, rtol=1e-5)

    # Training mode: every element is either dropped (0) or scaled by 1/keep_p.
    out_train = jax.block_until_ready(
        forward(x, training=True, key=jax.random.PRNGKey(123))
    )
    assert out_train.shape == (B, T, D)
    keep_prob = 1.0 - dropout_rate
    ref_scaled = ref / keep_prob
    is_zero = jnp.isclose(out_train, 0.0, atol=1e-6)
    is_scaled = jnp.isclose(out_train, ref_scaled, atol=1e-4, rtol=1e-4)
    assert bool(jnp.all(is_zero | is_scaled))

    print("KERNEL_OK")
</pallas_src>

<mosaic_0001>
module attributes {stable_mosaic.version = 11 : i64} {
  func.func @_pe_add_kernel(%arg0: i32, %arg1: i32, %arg2: memref<1x2x128xf32, #tpu.memory_space<vmem>>, %arg3: memref<2x128xf32, #tpu.memory_space<vmem>>, %arg4: memref<1x2x128xf32, #tpu.memory_space<vmem>>) attributes {dimension_semantics = [#tpu.dimension_semantics<parallel>, #tpu.dimension_semantics<parallel>], iteration_bounds = array<i64: 1, 2>, scalar_prefetch = 0 : i64, scratch_operands = 0 : i64, tpu.core_type = #tpu.core_type<tc>, window_params = [{transform_indices = @transform_0, window_bounds = array<i64: 1, 2, 128>}, {transform_indices = @transform_1, window_bounds = array<i64: 2, 128>}, {transform_indices = @transform_2, window_bounds = array<i64: 1, 2, 128>}]} {
    %c0 = arith.constant 0 : index
    %c0_0 = arith.constant 0 : index
    %c0_1 = arith.constant 0 : index
    %0 = vector.load %arg2[%c0, %c0_0, %c0_1] : memref<1x2x128xf32, #tpu.memory_space<vmem>>, vector<1x2x128xf32>
    %1 = vector.shape_cast %0 : vector<1x2x128xf32> to vector<2x128xf32>
    %cst = arith.constant 5.65685415 : f32
    %2 = vector.broadcast %cst : f32 to vector<2x128xf32>
    %3 = arith.mulf %1, %2 : vector<2x128xf32>
    %c0_2 = arith.constant 0 : index
    %c0_3 = arith.constant 0 : index
    %4 = vector.load %arg3[%c0_2, %c0_3] : memref<2x128xf32, #tpu.memory_space<vmem>>, vector<2x128xf32>
    %5 = arith.addf %3, %4 : vector<2x128xf32>
    %c0_4 = arith.constant 0 : index
    %c0_5 = arith.constant 0 : index
    %c0_6 = arith.constant 0 : index
    %6 = vector.load %arg4[%c0_4, %c0_5, %c0_6] : memref<1x2x128xf32, #tpu.memory_space<vmem>>, vector<1x2x128xf32>
    %7 = vector.shape_cast %6 : vector<1x2x128xf32> to vector<2x128xf32>
    %8 = vector.shape_cast %5 : vector<2x128xf32> to vector<1x2x128xf32>
    tpu.vector_store %arg4[%c0_4, %c0_5, %c0_6], %8 {strides = array<i32>} : memref<1x2x128xf32, #tpu.memory_space<vmem>>, vector<1x2x128xf32>,
    return
  }
  func.func @transform_0(%arg0: i32, %arg1: i32) -> (i32, i32, i32) {
    %c0_i32 = arith.constant 0 : i32
    %c0_i32_0 = arith.constant 0 : i32
    return %arg1, %arg0, %c0_i32 : i32, i32, i32
  }
  func.func @transform_1(%arg0: i32, %arg1: i32) -> (i32, i32) {
    %c0_i32 = arith.constant 0 : i32
    %c0_i32_0 = arith.constant 0 : i32
    return %arg0, %c0_i32 : i32, i32
  }
  func.func @transform_2(%arg0: i32, %arg1: i32) -> (i32, i32, i32) {
    %c0_i32 = arith.constant 0 : i32
    %c0_i32_0 = arith.constant 0 : i32
    return %arg1, %arg0, %c0_i32 : i32, i32, i32
  }
}

</mosaic_0001>

<llo_original>
// kernel: tpu_custom_call.1
$region0: #{tpu_custom_call.1}
  #allocation0 [shape = 'u32[]', space=smem, size = 0x4, offset = 0x4, fixed_abs, tag = 'smem constant byte address 0x4 - core index']
  #allocation1 [shape = 'u32[72,128]{1,0:T(1,128)}', space=vmem, size = 0x9000, scoped, tag = 'internal scratch']
  %s0 = inlined_call_operand.hbm [shape: f32[2,2,128], index: 0, kind: input, shape index: {}]
  %s1 = inlined_call_operand.hbm [shape: f32[2,128], index: 1, kind: input, shape index: {}]
  %s2 = inlined_call_operand.hbm [shape: f32[2,2,128], index: 2, kind: output, shape index: {}]
  %s3 = sld [smem:[#allocation0]]
  $region49: #{tpu_custom_call.1} parent=0
    _
  %s5 = ssub.s32 1, %s3
  %s6 = scalar_select 0, %s5, %s3
  $region1: #{tpu_custom_call.1} parent=0
    #allocation2 [shape = 'u8[2048]{0}', space=vmem, size = 0x800, scoped, tag = 'input window, operand 0']
    #allocation3 [shape = 's32[2]{0}', space=sflag, size = 0x8, scoped, tag = 'scoped memory for tpu_custom_call.1']
    #allocation4 [shape = 's32[2]{0}', space=sflag, size = 0x8, scoped, tag = 'scoped memory for tpu_custom_call.1']
    #allocation5 [shape = 'u8[1024]{0}', space=vmem, size = 0x400, scoped, tag = 'input window, operand 1, single buffered']
    #allocation6 [shape = 's32[1]{0}', space=sflag, size = 0x4, scoped, tag = 'scoped memory for tpu_custom_call.1']
    #allocation7 [shape = 'u8[2048]{0}', space=vmem, size = 0x800, scoped, tag = 'output window, operand 0']
    %7 = vsyncpa [#allocation3], 0
    %s8 = scalar_lea.sflag [#allocation3], 1
    %9 = vsyncpa %s8, 0
    %10 = vsyncpa [#allocation6], 0
    %11 = vsyncpa [#allocation4], 0
    %s12 = scalar_lea.sflag [#allocation4], 1
    %13 = vsyncpa %s12, 0
    loop: start=0, step=1, limit=4
    $region2: #{tpu_custom_call.1} parent=1 // loop_pre_header
      _
    $region3: #{tpu_custom_call.1} parent=1 // loop_header
      %s15 = sphi 0, %s19
      %p16 = scmp.ge.s32.totalorder %s15, 4
      %s22 = sphi 0, %s34
      %s23 = sphi 0, %s30
      %s24 = sphi 0, %s22
      %s25 = sphi 0, %s23
      %s26 = sphi 0, %s24
      %s27 = sphi 0, %s25
      %s39 = sphi 0, %s41
      %s42 = sphi 0, %s39
      %s43 = sphi 0, %s42
      %s59 = sphi 0, %s43
      %s65 = sphi 0, %s67
      %s68 = sphi 0, %s65
      %s69 = sphi 0, %s68
      %s85 = sphi 0, %s69
      %s93 = sphi 0, %s95
      %s96 = sphi 0, %s93
      %s97 = sphi 0, %s96
      %s113 = sphi 0, %s97
    $region4: #{tpu_custom_call.1} parent=1 // loop_header_branch
      %18 = sbr.rel (%p16) target = $region8
    $region5: #{tpu_custom_call.1} parent=1 // loop_body
      %s20 = ssub.s32 %s15, 1
      %s21 = ssub.s32 %s15, 2
      %s28 = sadd.s32 1, %s23
      %p29 = scmp.ge.s32.totalorder %s28, 2
      %s30 = scalar_select %p29, 0, %s28
      %s31 = sadd.s32 1, %s22
      %s32 = scalar_select %p29, %s31, %s22
      %p33 = scmp.ge.s32.totalorder %s32, 1
      %s34 = scalar_select %p33, 0, %s32
      %s35 = ssub.s32 %s23, %s30
      %s36 = ssub.s32 %s22, %s34
      %s37 = sor.u32 %s35, %s36
      %p38 = scmp.eq.s32.totalorder %s37, 0
      %s40 = sadd.s32 %s39, 1
      %s41 = scalar_select %p38, %s39, %s40
      %p44 = pneg %p38
      %p45 = scmp.eq.s32.totalorder %s15, 1
      %p46 = por %p44, %p45
      %p47 = scmp.ne.s32.totalorder %s39, %s42
      %p48 = scmp.eq.s32.totalorder %s15, 0
      %p49 = por %p47, %p48
      %p50 = scmp.ne.s32.totalorder %s39, %s42
      %p51 = scmp.eq.s32.totalorder %s20, 1
      %p52 = por %p50, %p51
      %p53 = scmp.ne.s32.totalorder %s42, %s43
      %p54 = scmp.eq.s32.totalorder %s20, 0
      %p55 = por %p53, %p54
      %p56 = scmp.ne.s32.totalorder %s42, %s43
      %p57 = scmp.eq.s32.totalorder %s21, 1
      %p58 = por %p56, %p57
      %p60 = scmp.ne.s32.totalorder %s43, %s59
      %p61 = scmp.eq.s32.totalorder %s21, 0
      %p62 = por %p60, %p61
      %s63 = ssub.s32 %s22, %s34
      %p64 = scmp.eq.s32.totalorder %s63, 0
      %s66 = sadd.s32 %s65, 1
      %s67 = scalar_select %p64, %s65, %s66
      %p70 = pneg %p64
      %p71 = scmp.eq.s32.totalorder %s15, 1
      %p72 = por %p70, %p71
      %p73 = scmp.ne.s32.totalorder %s65, %s68
      %p74 = scmp.eq.s32.totalorder %s15, 0
      %p75 = por %p73, %p74
      %p76 = scmp.ne.s32.totalorder %s65, %s68
      %p77 = scmp.eq.s32.totalorder %s20, 1
      %p78 = por %p76, %p77
      %p79 = scmp.ne.s32.totalorder %s68, %s69
      %p80 = scmp.eq.s32.totalorder %s20, 0
      %p81 = por %p79, %p80
      %p82 = scmp.ne.s32.totalorder %s68, %s69
      %p83 = scmp.eq.s32.totalorder %s21, 1
      %p84 = por %p82, %p83
      %p86 = scmp.ne.s32.totalorder %s69, %s85
      %p87 = scmp.eq.s32.totalorder %s21, 0
      %p88 = por %p86, %p87
      %s89 = ssub.s32 %s23, %s30
      %s90 = ssub.s32 %s22, %s34
      %s91 = sor.u32 %s89, %s90
      %p92 = scmp.eq.s32.totalorder %s91, 0
      %s94 = sadd.s32 %s93, 1
      %s95 = scalar_select %p92, %s93, %s94
      %p98 = pneg %p92
      %p99 = scmp.eq.s32.totalorder %s15, 1
      %p100 = por %p98, %p99
      %p101 = scmp.ne.s32.totalorder %s93, %s96
      %p102 = scmp.eq.s32.totalorder %s15, 0
      %p103 = por %p101, %p102
      %p104 = scmp.ne.s32.totalorder %s93, %s96
      %p105 = scmp.eq.s32.totalorder %s20, 1
      %p106 = por %p104, %p105
      %p107 = scmp.ne.s32.totalorder %s96, %s97
      %p108 = scmp.eq.s32.totalorder %s20, 0
      %p109 = por %p107, %p108
      %p110 = scmp.ne.s32.totalorder %s96, %s97
      %p111 = scmp.eq.s32.totalorder %s21, 1
      %p112 = por %p110, %p111
      %p114 = scmp.ne.s32.totalorder %s97, %s113
      %p115 = scmp.eq.s32.totalorder %s21, 0
      %p116 = por %p114, %p115
      %p117 = scmp.le.s32.totalorder 1, %s15
      %p118 = scmp.lt.s32.totalorder %s15, 3
      %p119 = pnand %p117, %p118
      %p120 = pneg %p119
      // Predicated region
      $region9: #{tpu_custom_call.1} parent=5 // pred_check
        _
      $region10: #{tpu_custom_call.1} parent=5 // pred_check_branch
        %122 = sbr.rel (%p119) target = $region12
      $region11: #{tpu_custom_call.1} parent=5 // pred_region
        %s123 = ssub.s32 %s15, 1
        // Predicated region
        $region13: #{tpu_custom_call.1} parent=11 // pred_check
          %p124 = pneg %p81
        $region14: #{tpu_custom_call.1} parent=11 // pred_check_branch
          %126 = sbr.rel (%p124) target = $region16
        $region15: #{tpu_custom_call.1} parent=11 // pred_region
          %128 = vsyncadd [#allocation6], 0
          %s129 = smul.addr %s24, 2
          %s130 = scalar_lea.hbm %s1, %s129
          %s132 = sshll.u32 %s130, 4
          %s133 = int_to_ptr.hbm [resolvable:$true] %s132
          %s134 = sshll.u32 [#allocation5], 4
          %s135 = int_to_ptr.vmem [resolvable:$true] %s134
          %137 = dma.hbm_to_vmem [thread:$0]  %s133, 32, %s135, [#allocation6]
        $region16: #{tpu_custom_call.1} parent=11 // pred_fallthru
          _
      $region12: #{tpu_custom_call.1} parent=5 // pred_fallthru
        _
      %p138 = scmp.lt.s32.totalorder %s15, 2
      // Predicated region
      $region17: #{tpu_custom_call.1} parent=5 // pred_check
        %p139 = pneg %p138
      $region18: #{tpu_custom_call.1} parent=5 // pred_check_branch
        %141 = sbr.rel (%p139) target = $region20
      $region19: #{tpu_custom_call.1} parent=5 // pred_region
        // Predicated region
        $region21: #{tpu_custom_call.1} parent=19 // pred_check
          %p142 = pneg %p49
        $region22: #{tpu_custom_call.1} parent=19 // pred_check_branch
          %144 = sbr.rel (%p142) target = $region24
        $region23: #{tpu_custom_call.1} parent=19 // pred_region
          %s145 = sand.u32 %s39, 1
          %s146 = scalar_lea.sflag [#allocation3], %s145
          %s147 = sand.u32 %s39, 1
          %s148 = smul.addr %s147, 2
          %s149 = scalar_lea.vmem [#allocation2], %s148
          %151 = vsyncadd %s146, 0
          %s152 = sadd.s32 %s22, %s23
          %s153 = smul.addr %s152, 2
          %s154 = scalar_lea.hbm %s0, %s153
          %s156 = sshll.u32 %s154, 4
          %s157 = int_to_ptr.hbm [resolvable:$true] %s156
          %s158 = sshll.u32 %s149, 4
          %s159 = int_to_ptr.vmem [resolvable:$true] %s158
          %161 = dma.hbm_to_vmem [thread:$0]  %s157, 32, %s159, %s146
        $region24: #{tpu_custom_call.1} parent=19 // pred_fallthru
          _
      $region20: #{tpu_custom_call.1} parent=5 // pred_fallthru
        _
      %p162 = scmp.le.s32.totalorder 1, %s15
      %p163 = scmp.lt.s32.totalorder %s15, 3
      %p164 = pnand %p162, %p163
      %p165 = pneg %p164
      // Predicated region
      $region25: #{tpu_custom_call.1} parent=5 // pred_check
        _
      $region26: #{tpu_custom_call.1} parent=5 // pred_check_branch
        %167 = sbr.rel (%p164) target = $region28
      $region27: #{tpu_custom_call.1} parent=5 // pred_region
        %s168 = ssub.s32 %s15, 1
        %s169 = sand.u32 %s42, 1
        %s170 = scalar_lea.sflag [#allocation3], %s169
        %s171 = sand.u32 %s42, 1
        %s172 = smul.addr %s171, 2
        %s173 = scalar_lea.vmem [#allocation2], %s172
        // Predicated region
        $region29: #{tpu_custom_call.1} parent=27 // pred_check
          %p174 = pneg %p55
        $region30: #{tpu_custom_call.1} parent=27 // pred_check_branch
          %176 = sbr.rel (%p174) target = $region32
        $region31: #{tpu_custom_call.1} parent=27 // pred_region
          %178 = dma.done %s170, 32
        $region32: #{tpu_custom_call.1} parent=27 // pred_fallthru
          _
        // Predicated region
        $region33: #{tpu_custom_call.1} parent=27 // pred_check
          %p179 = pneg %p81
        $region34: #{tpu_custom_call.1} parent=27 // pred_check_branch
          %181 = sbr.rel (%p179) target = $region36
        $region35: #{tpu_custom_call.1} parent=27 // pred_region
          %183 = dma.done [#allocation6], 32
        $region36: #{tpu_custom_call.1} parent=27 // pred_fallthru
          _
        %s184 = sand.u32 %s42, 1
        %s185 = scalar_lea.sflag [#allocation3], %s184
        %s186 = sand.u32 %s42, 1
        %s187 = smul.addr %s186, 2
        %s188 = scalar_lea.vmem [#allocation2], %s187
        %p189 = pneg %p55
        %p190 = pneg %p52
        %p191 = pneg %p81
        %p192 = pneg %p78
        %p193 = pneg %p109
        %p194 = pneg %p106
        %s195 = sand.u32 %s96, 1
        %s196 = scalar_lea.sflag [#allocation4], %s195
        %s197 = sand.u32 %s96, 1
        %s198 = smul.addr %s197, 2
        %s199 = scalar_lea.vmem [#allocation7], %s198
        %v200 = vld [vmem:[%s173] sm:$0x3]
        %v201 = vmul.f32 %v200, 5.656854
        %v202 = vld [vmem:[#allocation5] sm:$0x3]
        %v203 = vadd.f32 %v201, %v202
        %204 = vst [vmem:[%s199] sm:$0x3] %v203
        %s205 = sand.u32 %s96, 1
        %s206 = scalar_lea.sflag [#allocation4], %s205
        %s207 = sand.u32 %s96, 1
        %s208 = smul.addr %s207, 2
        %s209 = scalar_lea.vmem [#allocation7], %s208
        // Predicated region
        $region37: #{tpu_custom_call.1} parent=27 // pred_check
          %p210 = pneg %p106
        $region38: #{tpu_custom_call.1} parent=27 // pred_check_branch
          %212 = sbr.rel (%p210) target = $region40
        $region39: #{tpu_custom_call.1} parent=27 // pred_region
          %214 = vsyncadd %s206, 0
          %s215 = sadd.s32 %s24, %s25
          %s216 = smul.addr %s215, 2
          %s217 = scalar_lea.hbm %s2, %s216
          %s219 = sshll.u32 %s209, 4
          %s220 = int_to_ptr.vmem [resolvable:$true] %s219
          %s221 = sshll.u32 %s217, 4
          %s222 = int_to_ptr.hbm [resolvable:$true] %s221
          %224 = dma.vmem_to_hbm [thread:$0]  %s220, 32, %s222, %s206
        $region40: #{tpu_custom_call.1} parent=27 // pred_fallthru
          _
      $region28: #{tpu_custom_call.1} parent=5 // pred_fallthru
        _
      %p225 = scmp.le.s32.totalorder 2, %s15
      // Predicated region
      $region41: #{tpu_custom_call.1} parent=5 // pred_check
        %p226 = pneg %p225
      $region42: #{tpu_custom_call.1} parent=5 // pred_check_branch
        %228 = sbr.rel (%p226) target = $region44
      $region43: #{tpu_custom_call.1} parent=5 // pred_region
        %s229 = ssub.s32 %s15, 2
        // Predicated region
        $region45: #{tpu_custom_call.1} parent=43 // pred_check
          %p230 = pneg %p112
        $region46: #{tpu_custom_call.1} parent=43 // pred_check_branch
          %232 = sbr.rel (%p230) target = $region48
        $region47: #{tpu_custom_call.1} parent=43 // pred_region
          %s233 = sand.u32 %s97, 1
          %s234 = scalar_lea.sflag [#allocation4], %s233
          %s235 = sand.u32 %s97, 1
          %s236 = smul.addr %s235, 2
          %s237 = scalar_lea.vmem [#allocation7], %s236
          %239 = dma.done %s234, 32
        $region48: #{tpu_custom_call.1} parent=43 // pred_fallthru
          _
      $region44: #{tpu_custom_call.1} parent=5 // pred_fallthru
        _
    $region6: #{tpu_custom_call.1} parent=1 // loop_footer
      %s19 = sadd.s32 1, %s15
    $region7: #{tpu_custom_call.1} parent=1 // loop_footer_branch
      %14 = sbr.rel target = $region3
    $region8: #{tpu_custom_call.1} parent=1 // loop_exit
      _
    %240 = vsyncpa [#allocation3], 1
    %s241 = scalar_lea.sflag [#allocation3], 1
    %242 = vsyncpa %s241, 1
    %243 = vsyncpa [#allocation6], 1
    %244 = vsyncpa [#allocation4], 1
    %s245 = scalar_lea.sflag [#allocation4], 1
    %246 = vsyncpa %s245, 1

</llo_original>
